<compile_context>
chip_gen: v7x
topology: tpu7x:2x2x1
jax: 0.10.0
libtpu: 0.0.40
codegen_flags: <defaults>
</compile_context>

<pallas_src>
import numpy as np
import jax
import jax.numpy as jnp
from jax.experimental import pallas as pl
from jax.experimental.pallas import tpu as pltpu


H1, H2 = 512, 256
BN_EPS = 1e-5


def value_network_kernel(
    x_ref,                    # fused [states | actions | 0-pad]: (TB, KF) bf16
    w1_ref, b1_ref,           # BN-folded fcs1, K-padded: (KF, 512) bf16, (1, 512) f32
    w2a_ref, b2_ref,          # fc2 h1-part:               (512, 256) bf16, (1, 256) f32
    w2b_ref,                  # fc2 action-part, K-padded: (KF, 256) bf16
    w3r_ref, b3_ref,          # fc3 as a row:              (1, 256) f32, (1, 1) f32
    q_ref,                    # output row: (1, TB) f32  (lane-dense batch)
):
    x = x_ref[...]                                            # (TB, KF) bf16

    # --- fcs1 (+ folded eval-mode BatchNorm) + ReLU, K=128 MXU matmul --------
    h1 = jnp.dot(x, w1_ref[...], preferred_element_type=jnp.float32) + b1_ref[...]
    h1 = jnp.maximum(h1, 0.0)

    # --- fc2 on cat([h1, actions]) == h1 @ W2a + x_fused @ W2b_pad -----------
    h2 = (jnp.dot(h1.astype(jnp.bfloat16), w2a_ref[...],
                  preferred_element_type=jnp.float32)
          + jnp.dot(x, w2b_ref[...], preferred_element_type=jnp.float32)
          + b2_ref[...])
    h2 = jnp.maximum(h2, 0.0)

    # --- dropout(p=0.2): identity in eval mode -------------------------------
    # TODO(synk): training-mode dropout (PRNG mask) not emitted; eval semantics.

    # --- fc3 (256 -> 1) as VPU multiply + lane reduction, stored lane-dense --
    q = jnp.sum(h2 * w3r_ref[...], axis=-1)                   # (TB,)
    q_ref[...] = q[None, :] + b3_ref[...]                     # (1, TB)


def value_network_forward(states, actions, packed, *, block_b=1024, training=False):
    """Fused forward: Q(s, a) for a batch of (state, action) rows (eval mode)."""
    if training:
        # TODO(synk): training-mode BatchNorm (batch stats) and dropout not implemented.
        raise NotImplementedError("Kernel implements eval-mode semantics only.")

    B, S = states.shape
    A = actions.shape[1]
    w1p, b1, w2a, b2, w2bp, w3r, b3 = packed
    KF = w1p.shape[0]                       # fused input width (multiple of 128)
    assert S + A <= KF

    # Fused, lane-dense, bf16 input: [states | actions | zero pad] along KF lanes.
    x = jnp.zeros((B, KF), jnp.bfloat16)
    x = x.at[:, :S].set(states.astype(jnp.bfloat16))
    x = x.at[:, S:S + A].set(actions.astype(jnp.bfloat16))

    def rup(v, m):
        return ((v + m - 1) // m) * m

    # Batch tile: multiple of 8, large enough to amortize per-step overhead;
    # at large B keep >= 2 grid steps so v7x's two TensorCores both get work.
    TB = rup(B, 8)
    if B >= 256:
        TB = min(TB, rup(pl.cdiv(B, 2), 8))
    TB = min(TB, block_b)
    B_pad = rup(B, TB)
    if B_pad != B:
        x = jnp.pad(x, ((0, B_pad - B), (0, 0)))
    num_blocks = B_pad // TB

    def const_spec(shape):
        # Constant block index -> weight/bias stays VMEM-resident across steps.
        return pl.BlockSpec(shape, lambda i: (0, 0))

    q_rows = pl.pallas_call(
        value_network_kernel,
        out_shape=jax.ShapeDtypeStruct((num_blocks, TB), jnp.float32),
        grid=(num_blocks,),
        in_specs=[
            pl.BlockSpec((TB, KF), lambda i: (i, 0)),
            const_spec(w1p.shape), const_spec(b1.shape),
            const_spec(w2a.shape), const_spec(b2.shape),
            const_spec(w2bp.shape),
            const_spec(w3r.shape), const_spec(b3.shape),
        ],
        out_specs=pl.BlockSpec((1, TB), lambda i: (i, 0)),
        compiler_params=pltpu.CompilerParams(
            dimension_semantics=("parallel",)),
    )(x, w1p, b1, w2a, b2, w2bp, w3r, b3)

    # Lane-dense (num_blocks, TB) rows -> (B, 1) column expected by the module.
    return q_rows.reshape(-1)[:B].reshape(B, 1)


def init_raw_params(key, state_size, action_size):
    """f32 parameters mirroring the PyTorch module (weights stored (in, out))."""
    ks = jax.random.split(key, 6)

    def uniform(k, shape, lim):
        return jax.random.uniform(k, shape, jnp.float32, -lim, lim)

    return dict(
        # BatchNorm1d(state_size): eval-mode running stats + affine params.
        gamma=jnp.ones((state_size,), jnp.float32),
        beta=jnp.zeros((state_size,), jnp.float32),
        mu=jnp.zeros((state_size,), jnp.float32),
        var=jnp.ones((state_size,), jnp.float32),
        # fcs1: weight ~ U(-1/sqrt(512), 1/sqrt(512)) (hidden_init), bias PyTorch default.
        w1=uniform(ks[0], (state_size, H1), 1.0 / np.sqrt(H1)),
        b1=uniform(ks[1], (H1,), 1.0 / np.sqrt(state_size)),
        # fc2: (512 + action_size) -> 256, hidden_init weight, PyTorch-default bias.
        w2=uniform(ks[2], (H1 + action_size, H2), 1.0 / np.sqrt(H2)),
        b2=uniform(ks[3], (H2,), 1.0 / np.sqrt(H1 + action_size)),
        # fc3: weight ~ U(-3e-3, 3e-3), bias PyTorch default.
        w3=uniform(ks[4], (H2, 1), 3e-3),
        b3=uniform(ks[5], (1,), 1.0 / np.sqrt(H2)),
    )


def pack_params(raw):
    """Fold eval-mode BN into fcs1, split fc2, K-pad to 128 lanes, cast big weights to bf16."""
    scale = raw["gamma"] * jax.lax.rsqrt(raw["var"] + BN_EPS)   # (S,)
    shift = raw["beta"] - raw["mu"] * scale                     # (S,)
    w1f = scale[:, None] * raw["w1"]                            # (S, 512)
    b1f = raw["b1"] + shift @ raw["w1"]                         # (512,)

    S = w1f.shape[0]
    w2a = raw["w2"][:H1, :]                                     # (512, 256)
    w2b = raw["w2"][H1:, :]                                     # (A, 256)
    A = w2b.shape[0]

    # Pad the K dimension to a multiple of 128 so both "thin" contractions run
    # as lane-aligned MXU matmuls over the fused [states | actions] input.
    KF = max(128, ((S + A + 127) // 128) * 128)
    w1p = jnp.zeros((KF, H1), jnp.float32).at[:S].set(w1f)
    w2bp = jnp.zeros((KF, H2), jnp.float32).at[S:S + A].set(w2b)

    return (
        w1p.astype(jnp.bfloat16),
        b1f.reshape(1, H1),
        w2a.astype(jnp.bfloat16),
        raw["b2"].reshape(1, H2),
        w2bp.astype(jnp.bfloat16),
        raw["w3"].reshape(1, H2),                               # (256,1) -> (1,256) row
        raw["b3"].reshape(1, 1),
    )


def reference_forward_f32(states, actions, raw):
    """Plain-JAX f32 reference with the original (unfolded) eval-mode BatchNorm."""
    x = (states - raw["mu"]) * jax.lax.rsqrt(raw["var"] + BN_EPS)
    x = x * raw["gamma"] + raw["beta"]
    h1 = jnp.maximum(x @ raw["w1"] + raw["b1"], 0.0)
    h = jnp.concatenate([h1, actions], axis=1)
    h2 = jnp.maximum(h @ raw["w2"] + raw["b2"], 0.0)
    return h2 @ raw["w3"] + raw["b3"]


def reference_forward_mixed(states, actions, packed):
    """Plain-JAX reference mirroring the kernel's bf16/f32 precision choices."""
    w1p, b1, w2a, b2, w2bp, w3r, b3 = packed
    B, S = states.shape
    A = actions.shape[1]
    KF = w1p.shape[0]
    x = jnp.zeros((B, KF), jnp.bfloat16)
    x = x.at[:, :S].set(states.astype(jnp.bfloat16))
    x = x.at[:, S:S + A].set(actions.astype(jnp.bfloat16))
    h1 = jnp.maximum(
        jnp.dot(x, w1p, preferred_element_type=jnp.float32) + b1, 0.0)
    h2 = jnp.maximum(
        jnp.dot(h1.astype(jnp.bfloat16), w2a, preferred_element_type=jnp.float32)
        + jnp.dot(x, w2bp, preferred_element_type=jnp.float32) + b2, 0.0)
    return jnp.sum(h2 * w3r, axis=-1, keepdims=True) + b3


if __name__ == "__main__":
    state_size, action_size, batch = 33, 4, 8   # e.g. Reacher env sizes

    key = jax.random.PRNGKey(0)
    k_s, k_a, k_p = jax.random.split(key, 3)
    states = jax.random.normal(k_s, (batch, state_size), jnp.float32)
    actions = jax.random.uniform(k_a, (batch, action_size), jnp.float32, -1.0, 1.0)

    raw = init_raw_params(k_p, state_size, action_size)
    packed = pack_params(raw)

    q = value_network_forward(states, actions, packed)
    q = jax.block_until_ready(q)
    assert q.shape == (batch, 1)

    # Tight check against a reference mirroring the kernel's precision choices.
    q_mixed = reference_forward_mixed(states, actions, packed)
    np.testing.assert_allclose(np.asarray(q), np.asarray(q_mixed),
                               rtol=1e-2, atol=1e-4)

    # Looser check against the pure-f32 original semantics (bf16 weights/activations).
    q_f32 = reference_forward_f32(states, actions, raw)
    np.testing.assert_allclose(np.asarray(q), np.asarray(q_f32),
                               rtol=5e-2, atol=1e-2)

    print("KERNEL_OK")
</pallas_src>

<mosaic_0001>
module attributes {stable_mosaic.version = 11 : i64} {
  func.func @value_network_kernel(%arg0: i32, %arg1: memref<8x128xbf16, #tpu.memory_space<vmem>>, %arg2: memref<128x512xbf16, #tpu.memory_space<vmem>>, %arg3: memref<1x512xf32, #tpu.memory_space<vmem>>, %arg4: memref<512x256xbf16, #tpu.memory_space<vmem>>, %arg5: memref<1x256xf32, #tpu.memory_space<vmem>>, %arg6: memref<128x256xbf16, #tpu.memory_space<vmem>>, %arg7: memref<1x256xf32, #tpu.memory_space<vmem>>, %arg8: memref<1x1xf32, #tpu.memory_space<vmem>>, %arg9: memref<1x8xf32, #tpu.memory_space<vmem>>) attributes {dimension_semantics = [#tpu.dimension_semantics<parallel>], iteration_bounds = array<i64: 1>, scalar_prefetch = 0 : i64, scratch_operands = 0 : i64, tpu.core_type = #tpu.core_type<tc>, window_params = [{transform_indices = @transform_0, window_bounds = array<i64: 8, 128>}, {pipeline_mode = #tpu.pipeline_mode<synchronous>, transform_indices = @transform_1, window_bounds = array<i64: 128, 512>}, {pipeline_mode = #tpu.pipeline_mode<synchronous>, transform_indices = @transform_2, window_bounds = array<i64: 1, 512>}, {pipeline_mode = #tpu.pipeline_mode<synchronous>, transform_indices = @transform_3, window_bounds = array<i64: 512, 256>}, {pipeline_mode = #tpu.pipeline_mode<synchronous>, transform_indices = @transform_4, window_bounds = array<i64: 1, 256>}, {pipeline_mode = #tpu.pipeline_mode<synchronous>, transform_indices = @transform_5, window_bounds = array<i64: 128, 256>}, {pipeline_mode = #tpu.pipeline_mode<synchronous>, transform_indices = @transform_6, window_bounds = array<i64: 1, 256>}, {pipeline_mode = #tpu.pipeline_mode<synchronous>, transform_indices = @transform_7, window_bounds = array<i64: 1, 1>}, {transform_indices = @transform_8, window_bounds = array<i64: 1, 8>}]} {
    %c0 = arith.constant 0 : index
    %c0_0 = arith.constant 0 : index
    %0 = vector.load %arg1[%c0, %c0_0] : memref<8x128xbf16, #tpu.memory_space<vmem>>, vector<8x128xbf16>
    %c0_1 = arith.constant 0 : index
    %c0_2 = arith.constant 0 : index
    %1 = vector.load %arg2[%c0_1, %c0_2] : memref<128x512xbf16, #tpu.memory_space<vmem>>, vector<128x512xbf16>
    %cst = arith.constant dense<0.000000e+00> : vector<8x512xf32>
    %2 = tpu.matmul %0, %1, %cst {dimension_numbers = #tpu.dot_dimension_numbers<[1], [0], [0], [1], [0, 0, 1, 1], [], []>} : vector<8x128xbf16>, vector<128x512xbf16>, vector<8x512xf32> -> vector<8x512xf32>
    %c0_3 = arith.constant 0 : index
    %c0_4 = arith.constant 0 : index
    %3 = vector.load %arg3[%c0_3, %c0_4] : memref<1x512xf32, #tpu.memory_space<vmem>>, vector<1x512xf32>
    %4 = vector.broadcast %3 : vector<1x512xf32> to vector<8x512xf32>
    %5 = arith.addf %2, %4 : vector<8x512xf32>
    %cst_5 = arith.constant 0.000000e+00 : f32
    %6 = vector.broadcast %cst_5 : f32 to vector<8x512xf32>
    %7 = arith.maximumf %5, %6 : vector<8x512xf32>
    %8 = arith.truncf %7 : vector<8x512xf32> to vector<8x512xbf16>
    %c0_6 = arith.constant 0 : index
    %c0_7 = arith.constant 0 : index
    %9 = vector.load %arg4[%c0_6, %c0_7] : memref<512x256xbf16, #tpu.memory_space<vmem>>, vector<512x256xbf16>
    %cst_8 = arith.constant dense<0.000000e+00> : vector<8x256xf32>
    %10 = tpu.matmul %8, %9, %cst_8 {dimension_numbers = #tpu.dot_dimension_numbers<[1], [0], [0], [1], [0, 0, 1, 1], [], []>} : vector<8x512xbf16>, vector<512x256xbf16>, vector<8x256xf32> -> vector<8x256xf32>
    %c0_9 = arith.constant 0 : index
    %c0_10 = arith.constant 0 : index
    %11 = vector.load %arg6[%c0_9, %c0_10] : memref<128x256xbf16, #tpu.memory_space<vmem>>, vector<128x256xbf16>
    %cst_11 = arith.constant dense<0.000000e+00> : vector<8x256xf32>
    %12 = tpu.matmul %0, %11, %cst_11 {dimension_numbers = #tpu.dot_dimension_numbers<[1], [0], [0], [1], [0, 0, 1, 1], [], []>} : vector<8x128xbf16>, vector<128x256xbf16>, vector<8x256xf32> -> vector<8x256xf32>
    %13 = arith.addf %10, %12 : vector<8x256xf32>
    %c0_12 = arith.constant 0 : index
    %c0_13 = arith.constant 0 : index
    %14 = vector.load %arg5[%c0_12, %c0_13] : memref<1x256xf32, #tpu.memory_space<vmem>>, vector<1x256xf32>
    %15 = vector.broadcast %14 : vector<1x256xf32> to vector<8x256xf32>
    %16 = arith.addf %13, %15 : vector<8x256xf32>
    %cst_14 = arith.constant 0.000000e+00 : f32
    %17 = vector.broadcast %cst_14 : f32 to vector<8x256xf32>
    %18 = arith.maximumf %16, %17 : vector<8x256xf32>
    %c0_15 = arith.constant 0 : index
    %c0_16 = arith.constant 0 : index
    %19 = vector.load %arg7[%c0_15, %c0_16] : memref<1x256xf32, #tpu.memory_space<vmem>>, vector<1x256xf32>
    %20 = vector.broadcast %19 : vector<1x256xf32> to vector<8x256xf32>
    %21 = arith.mulf %18, %20 : vector<8x256xf32>
    %cst_17 = arith.constant dense<0.000000e+00> : vector<8xf32>
    %22 = vector.multi_reduction <add>, %21, %cst_17 [1] : vector<8x256xf32> to vector<8xf32>
    %23 = vector.shape_cast %22 : vector<8xf32> to vector<1x8xf32>
    %c0_18 = arith.constant 0 : index
    %c0_19 = arith.constant 0 : index
    %24 = vector.load %arg8[%c0_18, %c0_19] : memref<1x1xf32, #tpu.memory_space<vmem>>, vector<1x1xf32>
    %25 = vector.broadcast %24 : vector<1x1xf32> to vector<1x8xf32>
    %26 = arith.addf %23, %25 : vector<1x8xf32>
    %c0_20 = arith.constant 0 : index
    %c0_21 = arith.constant 0 : index
    %27 = vector.load %arg9[%c0_20, %c0_21] : memref<1x8xf32, #tpu.memory_space<vmem>>, vector<1x8xf32>
    tpu.vector_store %arg9[%c0_20, %c0_21], %26 {strides = array<i32>} : memref<1x8xf32, #tpu.memory_space<vmem>>, vector<1x8xf32>,
    return
  }
  func.func @transform_0(%arg0: i32) -> (i32, i32) {
    %c0_i32 = arith.constant 0 : i32
    %c0_i32_0 = arith.constant 0 : i32
    return %arg0, %c0_i32 : i32, i32
  }
  func.func @transform_1(%arg0: i32) -> (i32, i32) {
    %c0_i32 = arith.constant 0 : i32
    %c0_i32_0 = arith.constant 0 : i32
    %c0_i32_1 = arith.constant 0 : i32
    return %c0_i32, %c0_i32_0 : i32, i32
  }
  func.func @transform_2(%arg0: i32) -> (i32, i32) {
    %c0_i32 = arith.constant 0 : i32
    %c0_i32_0 = arith.constant 0 : i32
    %c0_i32_1 = arith.constant 0 : i32
    return %c0_i32, %c0_i32_0 : i32, i32
  }
  func.func @transform_3(%arg0: i32) -> (i32, i32) {
    %c0_i32 = arith.constant 0 : i32
    %c0_i32_0 = arith.constant 0 : i32
    %c0_i32_1 = arith.constant 0 : i32
    return %c0_i32, %c0_i32_0 : i32, i32
  }
  func.func @transform_4(%arg0: i32) -> (i32, i32) {
    %c0_i32 = arith.constant 0 : i32
    %c0_i32_0 = arith.constant 0 : i32
    %c0_i32_1 = arith.constant 0 : i32
    return %c0_i32, %c0_i32_0 : i32, i32
  }
  func.func @transform_5(%arg0: i32) -> (i32, i32) {
    %c0_i32 = arith.constant 0 : i32
    %c0_i32_0 = arith.constant 0 : i32
    %c0_i32_1 = arith.constant 0 : i32
    return %c0_i32, %c0_i32_0 : i32, i32
  }
  func.func @transform_6(%arg0: i32) -> (i32, i32) {
    %c0_i32 = arith.constant 0 : i32
    %c0_i32_0 = arith.constant 0 : i32
    %c0_i32_1 = arith.constant 0 : i32
    return %c0_i32, %c0_i32_0 : i32, i32
  }
  func.func @transform_7(%arg0: i32) -> (i32, i32) {
    %c0_i32 = arith.constant 0 : i32
    %c0_i32_0 = arith.constant 0 : i32
    %c0_i32_1 = arith.constant 0 : i32
    return %c0_i32, %c0_i32_0 : i32, i32
  }
  func.func @transform_8(%arg0: i32) -> (i32, i32) {
    %c0_i32 = arith.constant 0 : i32
    %c0_i32_0 = arith.constant 0 : i32
    return %arg0, %c0_i32 : i32, i32
  }
}

</mosaic_0001>

<llo_original>
// kernel: tpu_custom_call.1
$region0: #{tpu_custom_call.1}
  #allocation0 [shape = 'u32[]', space=smem, size = 0x4, offset = 0x4, fixed_abs, tag = 'smem constant byte address 0x4 - core index']
  #allocation1 [shape = 'u32[144,128]{1,0:T(1,128)}', space=vmem, size = 0x12000, scoped, tag = 'internal scratch']
  #allocation2 [shape = 'f32[1,1]{1,0:T(1,128)S(1)}', space=vmem, size = 0x200, scoped, tag = 'scoped memory for tpu_custom_call.1']
  %s0 = inlined_call_operand.hbm [shape: bf16[8,128], index: 0, kind: input, shape index: {}]
  %s1 = inlined_call_operand.hbm [shape: bf16[128,512], index: 1, kind: input, shape index: {}]
  %s2 = inlined_call_operand.vmem [shape: f32[1,512], index: 2, kind: input, shape index: {}]
  %s3 = inlined_call_operand.hbm [shape: bf16[512,256], index: 3, kind: input, shape index: {}]
  %s4 = inlined_call_operand.vmem [shape: f32[1,256], index: 4, kind: input, shape index: {}]
  %s5 = inlined_call_operand.hbm [shape: bf16[128,256], index: 5, kind: input, shape index: {}]
  %s6 = inlined_call_operand.vmem [shape: f32[1,256], index: 6, kind: input, shape index: {}]
  %s7 = inlined_call_operand.<no memory space> [shape: f32[1,1], index: 7, kind: input, shape index: {}]
  %s8 = inlined_call_operand.hbm [shape: f32[1,8], index: 8, kind: output, shape index: {}]
  %s9 = sld [smem:[#allocation0]]
  $region58: #{tpu_custom_call.1} parent=0
    _
  %s11 = ssub.s32 1, %s9
  %s12 = scalar_select 0, %s11, %s9
  %v13 = vstv %s7
  %14 = vst [vmem:[#allocation2] sm:$0x1] %v13
  $region1: #{tpu_custom_call.1} parent=0
    #allocation3 [shape = 'u8[2048]{0}', space=vmem, size = 0x800, scoped, tag = 'input window, operand 0, single buffered']
    #allocation4 [shape = 's32[1]{0}', space=sflag, size = 0x4, scoped, tag = 'scoped memory for tpu_custom_call.1']
    #allocation5 [shape = 's32[1]{0}', space=sflag, size = 0x4, scoped, tag = 'scoped memory for tpu_custom_call.1']
    #allocation6 [shape = 'u8[131072]{0}', space=vmem, size = 0x20000, scoped, tag = 'input window, operand 1, single buffered']
    #allocation7 [shape = 's32[1]{0}', space=sflag, size = 0x4, scoped, tag = 'scoped memory for tpu_custom_call.1']
    #allocation8 [shape = 'u8[262144]{0}', space=vmem, size = 0x40000, scoped, tag = 'input window, operand 3, single buffered']
    #allocation9 [shape = 'u8[65536]{0}', space=vmem, size = 0x10000, scoped, tag = 'input window, operand 5, single buffered']
    #allocation10 [shape = 's32[1]{0}', space=sflag, size = 0x4, scoped, tag = 'scoped memory for tpu_custom_call.1']
    #allocation11 [shape = 'u8[512]{0}', space=vmem, size = 0x400, scoped, tag = 'output window, operand 0, single buffered']
    %15 = vsyncpa [#allocation4], 0
    %16 = vsyncpa [#allocation7], 0
    %17 = vsyncpa [#allocation10], 0
    %18 = vsyncpa [#allocation5], 0
    // Predicated region
    $region2: #{tpu_custom_call.1} parent=1 // pred_check
      _
    $region3: #{tpu_custom_call.1} parent=1 // pred_check_branch
      %20 = sbr.rel (0) target = $region5
    $region4: #{tpu_custom_call.1} parent=1 // pred_region
      %s22 = ssub.s32 64, 64
      %23 = vsyncadd [#allocation4], %s22
      %s25 = sshll.u32 [#allocation3], 4
      %s26 = int_to_ptr.vmem [resolvable:$true] %s25
      %28 = dma.hbm_to_vmem [thread:$0]  %s0, 64, %s26, [#allocation4]
    $region5: #{tpu_custom_call.1} parent=1 // pred_fallthru
      _
    // Predicated region
    $region6: #{tpu_custom_call.1} parent=1 // pred_check
      _
    $region7: #{tpu_custom_call.1} parent=1 // pred_check_branch
      %30 = sbr.rel (0) target = $region9
    $region8: #{tpu_custom_call.1} parent=1 // pred_region
      %s32 = ssub.s32 4096, 4096
      %33 = vsyncadd [#allocation7], %s32
      %s34 = sshll.u32 [#allocation6], 4
      %s35 = int_to_ptr.vmem [resolvable:$true] %s34
      %40 = dma.hbm_to_vmem [thread:$0]  %s1, 4096, %s35, [#allocation7], 256, 256, 16
    $region9: #{tpu_custom_call.1} parent=1 // pred_fallthru
      _
    // Predicated region
    $region10: #{tpu_custom_call.1} parent=1 // pred_check
      _
    $region11: #{tpu_custom_call.1} parent=1 // pred_check_branch
      %42 = sbr.rel (0) target = $region13
    $region12: #{tpu_custom_call.1} parent=1 // pred_region
      _
    $region13: #{tpu_custom_call.1} parent=1 // pred_fallthru
      _
    // Predicated region
    $region14: #{tpu_custom_call.1} parent=1 // pred_check
      _
    $region15: #{tpu_custom_call.1} parent=1 // pred_check_branch
      %44 = sbr.rel (0) target = $region17
    $region16: #{tpu_custom_call.1} parent=1 // pred_region
      %s46 = ssub.s32 8192, 8192
      %47 = vsyncadd [#allocation7], %s46
      %s48 = sshll.u32 [#allocation8], 4
      %s49 = int_to_ptr.vmem [resolvable:$true] %s48
      %54 = dma.hbm_to_vmem [thread:$0]  %s3, 8192, %s49, [#allocation7], 128, 128, 8
    $region17: #{tpu_custom_call.1} parent=1 // pred_fallthru
      _
    // Predicated region
    $region18: #{tpu_custom_call.1} parent=1 // pred_check
      _
    $region19: #{tpu_custom_call.1} parent=1 // pred_check_branch
      %56 = sbr.rel (0) target = $region21
    $region20: #{tpu_custom_call.1} parent=1 // pred_region
      _
    $region21: #{tpu_custom_call.1} parent=1 // pred_fallthru
      _
    // Predicated region
    $region22: #{tpu_custom_call.1} parent=1 // pred_check
      _
    $region23: #{tpu_custom_call.1} parent=1 // pred_check_branch
      %58 = sbr.rel (0) target = $region25
    $region24: #{tpu_custom_call.1} parent=1 // pred_region
      %s60 = ssub.s32 2048, 2048
      %61 = vsyncadd [#allocation10], %s60
      %s62 = sshll.u32 [#allocation9], 4
      %s63 = int_to_ptr.vmem [resolvable:$true] %s62
      %68 = dma.hbm_to_vmem [thread:$0]  %s5, 2048, %s63, [#allocation10], 128, 128, 8
    $region25: #{tpu_custom_call.1} parent=1 // pred_fallthru
      _
    // Predicated region
    $region26: #{tpu_custom_call.1} parent=1 // pred_check
      _
    $region27: #{tpu_custom_call.1} parent=1 // pred_check_branch
      %70 = sbr.rel (0) target = $region29
    $region28: #{tpu_custom_call.1} parent=1 // pred_region
      _
    $region29: #{tpu_custom_call.1} parent=1 // pred_fallthru
      _
    // Predicated region
    $region30: #{tpu_custom_call.1} parent=1 // pred_check
      _
    $region31: #{tpu_custom_call.1} parent=1 // pred_check_branch
      %72 = sbr.rel (0) target = $region33
    $region32: #{tpu_custom_call.1} parent=1 // pred_region
      _
    $region33: #{tpu_custom_call.1} parent=1 // pred_fallthru
      _
    // Predicated region
    $region34: #{tpu_custom_call.1} parent=1 // pred_check
      _
    $region35: #{tpu_custom_call.1} parent=1 // pred_check_branch
      %74 = sbr.rel (0) target = $region37
    $region36: #{tpu_custom_call.1} parent=1 // pred_region
      %75 = dma.done [#allocation4], 64
    $region37: #{tpu_custom_call.1} parent=1 // pred_fallthru
      _
    // Predicated region
    $region38: #{tpu_custom_call.1} parent=1 // pred_check
      _
    $region39: #{tpu_custom_call.1} parent=1 // pred_check_branch
      %77 = sbr.rel (0) target = $region41
    $region40: #{tpu_custom_call.1} parent=1 // pred_region
      %78 = dma.done [#allocation7], 4096
    $region41: #{tpu_custom_call.1} parent=1 // pred_fallthru
      _
    // Predicated region
    $region42: #{tpu_custom_call.1} parent=1 // pred_check
      _
    $region43: #{tpu_custom_call.1} parent=1 // pred_check_branch
      %80 = sbr.rel (0) target = $region45
    $region44: #{tpu_custom_call.1} parent=1 // pred_region
      %81 = dma.done [#allocation7], 8192
    $region45: #{tpu_custom_call.1} parent=1 // pred_fallthru
      _
    // Predicated region
    $region46: #{tpu_custom_call.1} parent=1 // pred_check
      _
    $region47: #{tpu_custom_call.1} parent=1 // pred_check_branch
      %83 = sbr.rel (0) target = $region49
    $region48: #{tpu_custom_call.1} parent=1 // pred_region
      %84 = dma.done [#allocation10], 2048
    $region49: #{tpu_custom_call.1} parent=1 // pred_fallthru
      _
    %v86 = vld [vmem:[#allocation3] sm:$0xf]
    %v87 = vld [vmem:[#allocation6] sm:$0xff]
    %v88 = vld [vmem:[#allocation6 + $0x8] sm:$0xff]
    %v89 = vld [vmem:[#allocation6 + $0x10] sm:$0xff]
    %v90 = vld [vmem:[#allocation6 + $0x18] sm:$0xff]
    %v91 = vld [vmem:[#allocation6 + $0x20] sm:$0xff]
    %v92 = vld [vmem:[#allocation6 + $0x28] sm:$0xff]
    %v93 = vld [vmem:[#allocation6 + $0x30] sm:$0xff]
    %v94 = vld [vmem:[#allocation6 + $0x38] sm:$0xff]
    %v95 = vld [vmem:[#allocation6 + $0x40] sm:$0xff]
    %v96 = vld [vmem:[#allocation6 + $0x48] sm:$0xff]
    %v97 = vld [vmem:[#allocation6 + $0x50] sm:$0xff]
    %v98 = vld [vmem:[#allocation6 + $0x58] sm:$0xff]
    %v99 = vld [vmem:[#allocation6 + $0x60] sm:$0xff]
    %v100 = vld [vmem:[#allocation6 + $0x68] sm:$0xff]
    %v101 = vld [vmem:[#allocation6 + $0x70] sm:$0xff]
    %v102 = vld [vmem:[#allocation6 + $0x78] sm:$0xff]
    %v103 = vld [vmem:[#allocation6 + $0x80] sm:$0xff]
    %v104 = vld [vmem:[#allocation6 + $0x88] sm:$0xff]
    %v105 = vld [vmem:[#allocation6 + $0x90] sm:$0xff]
    %v106 = vld [vmem:[#allocation6 + $0x98] sm:$0xff]
    %v107 = vld [vmem:[#allocation6 + $0xa0] sm:$0xff]
    %v108 = vld [vmem:[#allocation6 + $0xa8] sm:$0xff]
    %v109 = vld [vmem:[#allocation6 + $0xb0] sm:$0xff]
    %v110 = vld [vmem:[#allocation6 + $0xb8] sm:$0xff]
    %v111 = vld [vmem:[#allocation6 + $0xc0] sm:$0xff]
    %v112 = vld [vmem:[#allocation6 + $0xc8] sm:$0xff]
    %v113 = vld [vmem:[#allocation6 + $0xd0] sm:$0xff]
    %v114 = vld [vmem:[#allocation6 + $0xd8] sm:$0xff]
    %v115 = vld [vmem:[#allocation6 + $0xe0] sm:$0xff]
    %v116 = vld [vmem:[#allocation6 + $0xe8] sm:$0xff]
    %v117 = vld [vmem:[#allocation6 + $0xf0] sm:$0xff]
    %v118 = vld [vmem:[#allocation6 + $0xf8] sm:$0xff]
    %v119 = vld [vmem:[%s2] sm:$0xf]
    %v121 = vlaneseq
    %v122 = vshrl.u32 %v121, 7
    %v123 = vsub.s32 0, %v122
    %v124 = vrot.slane %v119, %v123
    %v125 = vlaneseq
    %v126 = vshrl.u32 %v125, 7
    %v127 = vsub.s32 1, %v126
    %v128 = vrot.slane %v119, %v127
    %v129 = vlaneseq
    %v130 = vshrl.u32 %v129, 7
    %v131 = vsub.s32 2, %v130
    %v132 = vrot.slane %v119, %v131
    %v133 = vlaneseq
    %v134 = vshrl.u32 %v133, 7
    %v135 = vsub.s32 3, %v134
    %v136 = vrot.slane %v119, %v135
    %v173 = vunpack.c.l.b16 %v87
    %v174 = vunpack.c.h.b16 %v87
    %v175 = vunpack.c.l.b16 %v88
    %v176 = vunpack.c.h.b16 %v88
    %v177 = vunpack.c.l.b16 %v89
    %v178 = vunpack.c.h.b16 %v89
    %v179 = vunpack.c.l.b16 %v90
    %v180 = vunpack.c.h.b16 %v90
    %v181 = vunpack.c.l.b16 %v91
    %v182 = vunpack.c.h.b16 %v91
    %v183 = vunpack.c.l.b16 %v92
    %v184 = vunpack.c.h.b16 %v92
    %v185 = vunpack.c.l.b16 %v93
    %v186 = vunpack.c.h.b16 %v93
    %v187 = vunpack.c.l.b16 %v94
    %v188 = vunpack.c.h.b16 %v94
    %v189 = vunpack.c.l.b16 %v95
    %v190 = vunpack.c.h.b16 %v95
    %v191 = vunpack.c.l.b16 %v96
    %v192 = vunpack.c.h.b16 %v96
    %v193 = vunpack.c.l.b16 %v97
    %v194 = vunpack.c.h.b16 %v97
    %v195 = vunpack.c.l.b16 %v98
    %v196 = vunpack.c.h.b16 %v98
    %v197 = vunpack.c.l.b16 %v99
    %v198 = vunpack.c.h.b16 %v99
    %v199 = vunpack.c.l.b16 %v100
    %v200 = vunpack.c.h.b16 %v100
    %v201 = vunpack.c.l.b16 %v101
    %v202 = vunpack.c.h.b16 %v101
    %v203 = vunpack.c.l.b16 %v102
    %v204 = vunpack.c.h.b16 %v102
    %v205 = vunpack.c.l.b16 %v103
    %v206 = vunpack.c.h.b16 %v103
    %v207 = vunpack.c.l.b16 %v104
    %v208 = vunpack.c.h.b16 %v104
    %v209 = vunpack.c.l.b16 %v105
    %v210 = vunpack.c.h.b16 %v105
    %v211 = vunpack.c.l.b16 %v106
    %v212 = vunpack.c.h.b16 %v106
    %v213 = vunpack.c.l.b16 %v107
    %v214 = vunpack.c.h.b16 %v107
    %v215 = vunpack.c.l.b16 %v108
    %v216 = vunpack.c.h.b16 %v108
    %v217 = vunpack.c.l.b16 %v109
    %v218 = vunpack.c.h.b16 %v109
    %v219 = vunpack.c.l.b16 %v110
    %v220 = vunpack.c.h.b16 %v110
    %v221 = vunpack.c.l.b16 %v111
    %v222 = vunpack.c.h.b16 %v111
    %v223 = vunpack.c.l.b16 %v112
    %v224 = vunpack.c.h.b16 %v112
    %v225 = vunpack.c.l.b16 %v113
    %v226 = vunpack.c.h.b16 %v113
    %v227 = vunpack.c.l.b16 %v114
    %v228 = vunpack.c.h.b16 %v114
    %v229 = vunpack.c.l.b16 %v115
    %v230 = vunpack.c.h.b16 %v115
    %v231 = vunpack.c.l.b16 %v116
    %v232 = vunpack.c.h.b16 %v116
    %v233 = vunpack.c.l.b16 %v117
    %v234 = vunpack.c.h.b16 %v117
    %v235 = vunpack.c.l.b16 %v118
    %v236 = vunpack.c.h.b16 %v118
    %v237 = vpack.c.b16 %v177, %v173
    %v238 = vpack.c.b16 %v178, %v174
    %v239 = vpack.c.b16 %v179, %v175
    %v240 = vpack.c.b16 %v180, %v176
    %v241 = vpack.c.b16 %v185, %v181
    %v242 = vpack.c.b16 %v186, %v182
    %v243 = vpack.c.b16 %v187, %v183
    %v244 = vpack.c.b16 %v188, %v184
    %v245 = vpack.c.b16 %v193, %v189
    %v246 = vpack.c.b16 %v194, %v190
    %v247 = vpack.c.b16 %v195, %v191
    %v248 = vpack.c.b16 %v196, %v192
    %v249 = vpack.c.b16 %v201, %v197
    %v250 = vpack.c.b16 %v202, %v198
    %v251 = vpack.c.b16 %v203, %v199
    %v252 = vpack.c.b16 %v204, %v200
    %v253 = vpack.c.b16 %v209, %v205
    %v254 = vpack.c.b16 %v210, %v206
    %v255 = vpack.c.b16 %v211, %v207
    %v256 = vpack.c.b16 %v212, %v208
    %v257 = vpack.c.b16 %v217, %v213
    %v258 = vpack.c.b16 %v218, %v214
    %v259 = vpack.c.b16 %v219, %v215
    %v260 = vpack.c.b16 %v220, %v216
    %v261 = vpack.c.b16 %v225, %v221
    %v262 = vpack.c.b16 %v226, %v222
    %v263 = vpack.c.b16 %v227, %v223
    %v264 = vpack.c.b16 %v228, %v224
    %v265 = vpack.c.b16 %v233, %v229
    %v266 = vpack.c.b16 %v234, %v230
    %v267 = vpack.c.b16 %v235, %v231
    %v268 = vpack.c.b16 %v236, %v232
    %301 = vmatprep.subr.bf16.mxu0 %v238
    %302 = vmatpush1.bf16.msra.mxu0 %v237
    %303 = vmatprep.subr.bf16.mxu0 %v242
    %304 = vmatpush1.bf16.msra.mxu0 %v241
    %305 = vmatprep.subr.bf16.mxu0 %v246
    %306 = vmatpush1.bf16.msra.mxu0 %v245
    %307 = vmatprep.subr.bf16.mxu0 %v250
    %308 = vmatpush1.bf16.msra.mxu0 %v249
    %309 = vmatprep.subr.bf16.mxu0 %v254
    %310 = vmatpush1.bf16.msra.mxu0 %v253
    %311 = vmatprep.subr.bf16.mxu0 %v258
    %312 = vmatpush1.bf16.msra.mxu0 %v257
    %313 = vmatprep.subr.bf16.mxu0 %v262
    %314 = vmatpush1.bf16.msra.mxu0 %v261
    %315 = vmatprep.subr.bf16.mxu0 %v266
    %316 = vmatpush1.bf16.msra.mxu0 %v265
    %317 = vmatprep.subr.bf16.mxu0 0
    %318 = vmatpush1.bf16.msra.mxu0 0
    %319 = vmatprep.subr.bf16.mxu0 0
    %320 = vmatpush1.bf16.msra.mxu0 0
    %321 = vmatprep.subr.bf16.mxu0 0
    %322 = vmatpush1.bf16.msra.mxu0 0
    %323 = vmatprep.subr.bf16.mxu0 0
    %324 = vmatpush1.bf16.msra.mxu0 0
    %325 = vmatprep.subr.bf16.mxu0 0
    %326 = vmatpush1.bf16.msra.mxu0 0
    %327 = vmatprep.subr.bf16.mxu0 0
    %328 = vmatpush1.bf16.msra.mxu0 0
    %329 = vmatprep.subr.bf16.mxu0 0
    %330 = vmatpush1.bf16.msra.mxu0 0
    %331 = vmatprep.subr.bf16.mxu0 0
    %332 = vmatpush1.bf16.msra.mxu0 0
    %333 = vmatprep.mubr.bf16.mxu0 0
    %334 = vmatmul.mubr.bf16.gmra.mrb[0].mxu0 %v86
    %v335 = vpop.f32.mrb[0].mxu0
    %v336 = vadd.f32 %v124, %v335
    %v337 = vpop.f32.mrb[0].mxu0
    %v338 = vadd.f32 %v128, %v337
    %v339 = vpop.f32.mrb[0].mxu0
    %v340 = vpop.f32.mrb[0].mxu0
    %341 = vdwg.mxu0
    %342 = vmatprep.subr.bf16.mxu0 %v240
    %343 = vmatpush1.bf16.msra.mxu0 %v239
    %344 = vmatprep.subr.bf16.mxu0 %v244
    %345 = vmatpush1.bf16.msra.mxu0 %v243
    %346 = vmatprep.subr.bf16.mxu0 %v248
    %347 = vmatpush1.bf16.msra.mxu0 %v247
    %348 = vmatprep.subr.bf16.mxu0 %v252
    %349 = vmatpush1.bf16.msra.mxu0 %v251
    %350 = vmatprep.subr.bf16.mxu0 %v256
    %351 = vmatpush1.bf16.msra.mxu0 %v255
    %352 = vmatprep.subr.bf16.mxu0 %v260
    %353 = vmatpush1.bf16.msra.mxu0 %v259
    %354 = vmatprep.subr.bf16.mxu0 %v264
    %355 = vmatpush1.bf16.msra.mxu0 %v263
    %356 = vmatprep.subr.bf16.mxu0 %v268
    %357 = vmatpush1.bf16.msra.mxu0 %v267
    %358 = vmatprep.subr.bf16.mxu0 0
    %359 = vmatpush1.bf16.msra.mxu0 0
    %360 = vmatprep.subr.bf16.mxu0 0
    %361 = vmatpush1.bf16.msra.mxu0 0
    %362 = vmatprep.subr.bf16.mxu0 0
    %363 = vmatpush1.bf16.msra.mxu0 0
    %364 = vmatprep.subr.bf16.mxu0 0
    %365 = vmatpush1.bf16.msra.mxu0 0
    %366 = vmatprep.subr.bf16.mxu0 0
    %367 = vmatpush1.bf16.msra.mxu0 0
    %368 = vmatprep.subr.bf16.mxu0 0
    %369 = vmatpush1.bf16.msra.mxu0 0
    %370 = vmatprep.subr.bf16.mxu0 0
    %371 = vmatpush1.bf16.msra.mxu0 0
    %372 = vmatprep.subr.bf16.mxu0 0
    %373 = vmatpush1.bf16.msra.mxu0 0
    %374 = vmatprep.mubr.bf16.mxu0 0
    %375 = vmatmul.mubr.bf16.gmra.mrb[0].mxu0 %v86
    %v376 = vpop.f32.mrb[0].mxu0
    %v377 = vadd.f32 %v132, %v376
    %v378 = vpop.f32.mrb[0].mxu0
    %v379 = vadd.f32 %v136, %v378
    %v380 = vpop.f32.mrb[0].mxu0
    %v381 = vpop.f32.mrb[0].mxu0
    %382 = vdwg.mxu0
    %v383 = vmax.f32 %v336, 0.0
    %v384 = vmax.f32 %v338, 0.0
    %v385 = vmax.f32 %v377, 0.0
    %v386 = vmax.f32 %v379, 0.0
    %v387 = vpack.c.bf16 %v383, %v383
    %v388 = vpack.c.bf16 %v384, %v384
    %v389 = vpack.c.bf16 %v385, %v385
    %v390 = vpack.c.bf16 %v386, %v386
    %v391 = vld [vmem:[#allocation8] sm:$0xff]
    %v392 = vld [vmem:[#allocation8 + $0x8] sm:$0xff]
    %v393 = vld [vmem:[#allocation8 + $0x10] sm:$0xff]
    %v394 = vld [vmem:[#allocation8 + $0x18] sm:$0xff]
    %v395 = vld [vmem:[#allocation8 + $0x20] sm:$0xff]
    %v396 = vld [vmem:[#allocation8 + $0x28] sm:$0xff]
    %v397 = vld [vmem:[#allocation8 + $0x30] sm:$0xff]
    %v398 = vld [vmem:[#allocation8 + $0x38] sm:$0xff]
    %v399 = vld [vmem:[#allocation8 + $0x40] sm:$0xff]
    %v400 = vld [vmem:[#allocation8 + $0x48] sm:$0xff]
    %v401 = vld [vmem:[#allocation8 + $0x50] sm:$0xff]
    %v402 = vld [vmem:[#allocation8 + $0x58] sm:$0xff]
    %v403 = vld [vmem:[#allocation8 + $0x60] sm:$0xff]
    %v404 = vld [vmem:[#allocation8 + $0x68] sm:$0xff]
    %v405 = vld [vmem:[#allocation8 + $0x70] sm:$0xff]
    %v406 = vld [vmem:[#allocation8 + $0x78] sm:$0xff]
    %v407 = vld [vmem:[#allocation8 + $0x80] sm:$0xff]
    %v408 = vld [vmem:[#allocation8 + $0x88] sm:$0xff]
    %v409 = vld [vmem:[#allocation8 + $0x90] sm:$0xff]
    %v410 = vld [vmem:[#allocation8 + $0x98] sm:$0xff]
    %v411 = vld [vmem:[#allocation8 + $0xa0] sm:$0xff]
    %v412 = vld [vmem:[#allocation8 + $0xa8] sm:$0xff]
    %v413 = vld [vmem:[#allocation8 + $0xb0] sm:$0xff]
    %v414 = vld [vmem:[#allocation8 + $0xb8] sm:$0xff]
    %v415 = vld [vmem:[#allocation8 + $0xc0] sm:$0xff]
    %v416 = vld [vmem:[#allocation8 + $0xc8] sm:$0xff]
    %v417 = vld [vmem:[#allocation8 + $0xd0] sm:$0xff]
    %v418 = vld [vmem:[#allocation8 + $0xd8] sm:$0xff]
    %v419 = vld [vmem:[#allocation8 + $0xe0] sm:$0xff]
    %v420 = vld [vmem:[#allocation8 + $0xe8] sm:$0xff]
    %v421 = vld [vmem:[#allocation8 + $0xf0] sm:$0xff]
    %v422 = vld [vmem:[#allocation8 + $0xf8] sm:$0xff]
    %v423 = vld [vmem:[#allocation8 + $0x100] sm:$0xff]
    %v424 = vld [vmem:[#allocation8 + $0x108] sm:$0xff]
    %v425 = vld [vmem:[#allocation8 + $0x110] sm:$0xff]
    %v426 = vld [vmem:[#allocation8 + $0x118] sm:$0xff]
    %v427 = vld [vmem:[#allocation8 + $0x120] sm:$0xff]
    %v428 = vld [vmem:[#allocation8 + $0x128] sm:$0xff]
    %v429 = vld [vmem:[#allocation8 + $0x130] sm:$0xff]
    %v430 = vld [vmem:[#allocation8 + $0x138] sm:$0xff]
    %v431 = vld [vmem:[#allocation8 + $0x140] sm:$0xff]
    %v432 = vld [vmem:[#allocation8 + $0x148] sm:$0xff]
    %v433 = vld [vmem:[#allocation8 + $0x150] sm:$0xff]
    %v434 = vld [vmem:[#allocation8 + $0x158] sm:$0xff]
    %v435 = vld [vmem:[#allocation8 + $0x160] sm:$0xff]
    %v436 = vld [vmem:[#allocation8 + $0x168] sm:$0xff]
    %v437 = vld [vmem:[#allocation8 + $0x170] sm:$0xff]
    %v438 = vld [vmem:[#allocation8 + $0x178] sm:$0xff]
    %v439 = vld [vmem:[#allocation8 + $0x180] sm:$0xff]
    %v440 = vld [vmem:[#allocation8 + $0x188] sm:$0xff]
    %v441 = vld [vmem:[#allocation8 + $0x190] sm:$0xff]
    %v442 = vld [vmem:[#allocation8 + $0x198] sm:$0xff]
    %v443 = vld [vmem:[#allocation8 + $0x1a0] sm:$0xff]
    %v444 = vld [vmem:[#allocation8 + $0x1a8] sm:$0xff]
    %v445 = vld [vmem:[#allocation8 + $0x1b0] sm:$0xff]
    %v446 = vld [vmem:[#allocation8 + $0x1b8] sm:$0xff]
    %v447 = vld [vmem:[#allocation8 + $0x1c0] sm:$0xff]
    %v448 = vld [vmem:[#allocation8 + $0x1c8] sm:$0xff]
    %v449 = vld [vmem:[#allocation8 + $0x1d0] sm:$0xff]
    %v450 = vld [vmem:[#allocation8 + $0x1d8] sm:$0xff]
    %v451 = vld [vmem:[#allocation8 + $0x1e0] sm:$0xff]
    %v452 = vld [vmem:[#allocation8 + $0x1e8] sm:$0xff]
    %v453 = vld [vmem:[#allocation8 + $0x1f0] sm:$0xff]
    %v454 = vld [vmem:[#allocation8 + $0x1f8] sm:$0xff]
    %v455 = vld [vmem:[#allocation9] sm:$0xff]
    %v456 = vld [vmem:[#allocation9 + $0x8] sm:$0xff]
    %v457 = vld [vmem:[#allocation9 + $0x10] sm:$0xff]
    %v458 = vld [vmem:[#allocation9 + $0x18] sm:$0xff]
    %v459 = vld [vmem:[#allocation9 + $0x20] sm:$0xff]
    %v460 = vld [vmem:[#allocation9 + $0x28] sm:$0xff]
    %v461 = vld [vmem:[#allocation9 + $0x30] sm:$0xff]
    %v462 = vld [vmem:[#allocation9 + $0x38] sm:$0xff]
    %v463 = vld [vmem:[#allocation9 + $0x40] sm:$0xff]
    %v464 = vld [vmem:[#allocation9 + $0x48] sm:$0xff]
    %v465 = vld [vmem:[#allocation9 + $0x50] sm:$0xff]
    %v466 = vld [vmem:[#allocation9 + $0x58] sm:$0xff]
    %v467 = vld [vmem:[#allocation9 + $0x60] sm:$0xff]
    %v468 = vld [vmem:[#allocation9 + $0x68] sm:$0xff]
    %v469 = vld [vmem:[#allocation9 + $0x70] sm:$0xff]
    %v470 = vld [vmem:[#allocation9 + $0x78] sm:$0xff]
    %v487 = vunpack.c.l.b16 %v455
    %v488 = vunpack.c.h.b16 %v455
    %v489 = vunpack.c.l.b16 %v456
    %v490 = vunpack.c.h.b16 %v456
    %v491 = vunpack.c.l.b16 %v457
    %v492 = vunpack.c.h.b16 %v457
    %v493 = vunpack.c.l.b16 %v458
    %v494 = vunpack.c.h.b16 %v458
    %v495 = vunpack.c.l.b16 %v459
    %v496 = vunpack.c.h.b16 %v459
    %v497 = vunpack.c.l.b16 %v460
    %v498 = vunpack.c.h.b16 %v460
    %v499 = vunpack.c.l.b16 %v461
    %v500 = vunpack.c.h.b16 %v461
    %v501 = vunpack.c.l.b16 %v462
    %v502 = vunpack.c.h.b16 %v462
    %v503 = vunpack.c.l.b16 %v463
    %v504 = vunpack.c.h.b16 %v463
    %v505 = vunpack.c.l.b16 %v464
    %v506 = vunpack.c.h.b16 %v464
    %v507 = vunpack.c.l.b16 %v465
    %v508 = vunpack.c.h.b16 %v465
    %v509 = vunpack.c.l.b16 %v466
    %v510 = vunpack.c.h.b16 %v466
    %v511 = vunpack.c.l.b16 %v467
    %v512 = vunpack.c.h.b16 %v467
    %v513 = vunpack.c.l.b16 %v468
    %v514 = vunpack.c.h.b16 %v468
    %v515 = vunpack.c.l.b16 %v469
    %v516 = vunpack.c.h.b16 %v469
    %v517 = vunpack.c.l.b16 %v470
    %v518 = vunpack.c.h.b16 %v470
    %v519 = vpack.c.b16 %v489, %v487
    %v520 = vpack.c.b16 %v490, %v488
    %v521 = vpack.c.b16 %v493, %v491
    %v522 = vpack.c.b16 %v494, %v492
    %v523 = vpack.c.b16 %v497, %v495
    %v524 = vpack.c.b16 %v498, %v496
    %v525 = vpack.c.b16 %v501, %v499
    %v526 = vpack.c.b16 %v502, %v500
    %v527 = vpack.c.b16 %v505, %v503
    %v528 = vpack.c.b16 %v506, %v504
    %v529 = vpack.c.b16 %v509, %v507
    %v530 = vpack.c.b16 %v510, %v508
    %v531 = vpack.c.b16 %v513, %v511
    %v532 = vpack.c.b16 %v514, %v512
    %v533 = vpack.c.b16 %v517, %v515
    %v534 = vpack.c.b16 %v518, %v516
    %551 = vmatprep.subr.bf16.mxu0 %v520
    %552 = vmatpush1.bf16.msra.mxu0 %v519
    %553 = vmatprep.subr.bf16.mxu0 %v522
    %554 = vmatpush1.bf16.msra.mxu0 %v521
    %555 = vmatprep.subr.bf16.mxu0 %v524
    %556 = vmatpush1.bf16.msra.mxu0 %v523
    %557 = vmatprep.subr.bf16.mxu0 %v526
    %558 = vmatpush1.bf16.msra.mxu0 %v525
    %559 = vmatprep.subr.bf16.mxu0 %v528
    %560 = vmatpush1.bf16.msra.mxu0 %v527
    %561 = vmatprep.subr.bf16.mxu0 %v530
    %562 = vmatpush1.bf16.msra.mxu0 %v529
    %563 = vmatprep.subr.bf16.mxu0 %v532
    %564 = vmatpush1.bf16.msra.mxu0 %v531
    %565 = vmatprep.subr.bf16.mxu0 %v534
    %566 = vmatpush1.bf16.msra.mxu0 %v533
    %567 = vmatprep.subr.bf16.mxu0 0
    %568 = vmatpush1.bf16.msra.mxu0 0
    %569 = vmatprep.subr.bf16.mxu0 0
    %570 = vmatpush1.bf16.msra.mxu0 0
    %571 = vmatprep.subr.bf16.mxu0 0
    %572 = vmatpush1.bf16.msra.mxu0 0
    %573 = vmatprep.subr.bf16.mxu0 0
    %574 = vmatpush1.bf16.msra.mxu0 0
    %575 = vmatprep.subr.bf16.mxu0 0
    %576 = vmatpush1.bf16.msra.mxu0 0
    %577 = vmatprep.subr.bf16.mxu0 0
    %578 = vmatpush1.bf16.msra.mxu0 0
    %579 = vmatprep.subr.bf16.mxu0 0
    %580 = vmatpush1.bf16.msra.mxu0 0
    %581 = vmatprep.subr.bf16.mxu0 0
    %582 = vmatpush1.bf16.msra.mxu0 0
    %583 = vmatprep.mubr.bf16.mxu0 0
    %584 = vmatmul.mubr.bf16.gmra.mrb[0].mxu0 %v86
    %v585 = vpop.f32.mrb[0].mxu0
    %v586 = vadd.f32 0.0, %v585
    %v587 = vpop.f32.mrb[0].mxu0
    %v588 = vadd.f32 0.0, %v587
    %v589 = vpop.f32.mrb[0].mxu0
    %v590 = vpop.f32.mrb[0].mxu0
    %591 = vdwg.mxu0
    %v656 = vunpack.c.l.b16 %v391
    %v657 = vunpack.c.h.b16 %v391
    %v658 = vunpack.c.l.b16 %v392
    %v659 = vunpack.c.h.b16 %v392
    %v660 = vunpack.c.l.b16 %v393
    %v661 = vunpack.c.h.b16 %v393
    %v662 = vunpack.c.l.b16 %v394
    %v663 = vunpack.c.h.b16 %v394
    %v664 = vunpack.c.l.b16 %v395
    %v665 = vunpack.c.h.b16 %v395
    %v666 = vunpack.c.l.b16 %v396
    %v667 = vunpack.c.h.b16 %v396
    %v668 = vunpack.c.l.b16 %v397
    %v669 = vunpack.c.h.b16 %v397
    %v670 = vunpack.c.l.b16 %v398
    %v671 = vunpack.c.h.b16 %v398
    %v672 = vunpack.c.l.b16 %v399
    %v673 = vunpack.c.h.b16 %v399
    %v674 = vunpack.c.l.b16 %v400
    %v675 = vunpack.c.h.b16 %v400
    %v676 = vunpack.c.l.b16 %v401
    %v677 = vunpack.c.h.b16 %v401
    %v678 = vunpack.c.l.b16 %v402
    %v679 = vunpack.c.h.b16 %v402
    %v680 = vunpack.c.l.b16 %v403
    %v681 = vunpack.c.h.b16 %v403
    %v682 = vunpack.c.l.b16 %v404
    %v683 = vunpack.c.h.b16 %v404
    %v684 = vunpack.c.l.b16 %v405
    %v685 = vunpack.c.h.b16 %v405
    %v686 = vunpack.c.l.b16 %v406
    %v687 = vunpack.c.h.b16 %v406
    %v688 = vunpack.c.l.b16 %v407
    %v689 = vunpack.c.h.b16 %v407
    %v690 = vunpack.c.l.b16 %v408
    %v691 = vunpack.c.h.b16 %v408
    %v692 = vunpack.c.l.b16 %v409
    %v693 = vunpack.c.h.b16 %v409
    %v694 = vunpack.c.l.b16 %v410
    %v695 = vunpack.c.h.b16 %v410
    %v696 = vunpack.c.l.b16 %v411
    %v697 = vunpack.c.h.b16 %v411
    %v698 = vunpack.c.l.b16 %v412
    %v699 = vunpack.c.h.b16 %v412
    %v700 = vunpack.c.l.b16 %v413
    %v701 = vunpack.c.h.b16 %v413
    %v702 = vunpack.c.l.b16 %v414
    %v703 = vunpack.c.h.b16 %v414
    %v704 = vunpack.c.l.b16 %v415
    %v705 = vunpack.c.h.b16 %v415
    %v706 = vunpack.c.l.b16 %v416
    %v707 = vunpack.c.h.b16 %v416
    %v708 = vunpack.c.l.b16 %v417
    %v709 = vunpack.c.h.b16 %v417
    %v710 = vunpack.c.l.b16 %v418
    %v711 = vunpack.c.h.b16 %v418
    %v712 = vunpack.c.l.b16 %v419
    %v713 = vunpack.c.h.b16 %v419
    %v714 = vunpack.c.l.b16 %v420
    %v715 = vunpack.c.h.b16 %v420
    %v716 = vunpack.c.l.b16 %v421
    %v717 = vunpack.c.h.b16 %v421
    %v718 = vunpack.c.l.b16 %v422
    %v719 = vunpack.c.h.b16 %v422
    %v720 = vunpack.c.l.b16 %v423
    %v721 = vunpack.c.h.b16 %v423
    %v722 = vunpack.c.l.b16 %v424
    %v723 = vunpack.c.h.b16 %v424
    %v724 = vunpack.c.l.b16 %v425
    %v725 = vunpack.c.h.b16 %v425
    %v726 = vunpack.c.l.b16 %v426
    %v727 = vunpack.c.h.b16 %v426
    %v728 = vunpack.c.l.b16 %v427
    %v729 = vunpack.c.h.b16 %v427
    %v730 = vunpack.c.l.b16 %v428
    %v731 = vunpack.c.h.b16 %v428
    %v732 = vunpack.c.l.b16 %v429
    %v733 = vunpack.c.h.b16 %v429
    %v734 = vunpack.c.l.b16 %v430
    %v735 = vunpack.c.h.b16 %v430
    %v736 = vunpack.c.l.b16 %v431
    %v737 = vunpack.c.h.b16 %v431
    %v738 = vunpack.c.l.b16 %v432
    %v739 = vunpack.c.h.b16 %v432
    %v740 = vunpack.c.l.b16 %v433
    %v741 = vunpack.c.h.b16 %v433
    %v742 = vunpack.c.l.b16 %v434
    %v743 = vunpack.c.h.b16 %v434
    %v744 = vunpack.c.l.b16 %v435
    %v745 = vunpack.c.h.b16 %v435
    %v746 = vunpack.c.l.b16 %v436
    %v747 = vunpack.c.h.b16 %v436
    %v748 = vunpack.c.l.b16 %v437
    %v749 = vunpack.c.h.b16 %v437
    %v750 = vunpack.c.l.b16 %v438
    %v751 = vunpack.c.h.b16 %v438
    %v752 = vunpack.c.l.b16 %v439
    %v753 = vunpack.c.h.b16 %v439
    %v754 = vunpack.c.l.b16 %v440
    %v755 = vunpack.c.h.b16 %v440
    %v756 = vunpack.c.l.b16 %v441
    %v757 = vunpack.c.h.b16 %v441
    %v758 = vunpack.c.l.b16 %v442
    %v759 = vunpack.c.h.b16 %v442
    %v760 = vunpack.c.l.b16 %v443
    %v761 = vunpack.c.h.b16 %v443
    %v762 = vunpack.c.l.b16 %v444
    %v763 = vunpack.c.h.b16 %v444
    %v764 = vunpack.c.l.b16 %v445
    %v765 = vunpack.c.h.b16 %v445
    %v766 = vunpack.c.l.b16 %v446
    %v767 = vunpack.c.h.b16 %v446
    %v768 = vunpack.c.l.b16 %v447
    %v769 = vunpack.c.h.b16 %v447
    %v770 = vunpack.c.l.b16 %v448
    %v771 = vunpack.c.h.b16 %v448
    %v772 = vunpack.c.l.b16 %v449
    %v773 = vunpack.c.h.b16 %v449
    %v774 = vunpack.c.l.b16 %v450
    %v775 = vunpack.c.h.b16 %v450
    %v776 = vunpack.c.l.b16 %v451
    %v777 = vunpack.c.h.b16 %v451
    %v778 = vunpack.c.l.b16 %v452
    %v779 = vunpack.c.h.b16 %v452
    %v780 = vunpack.c.l.b16 %v453
    %v781 = vunpack.c.h.b16 %v453
    %v782 = vunpack.c.l.b16 %v454
    %v783 = vunpack.c.h.b16 %v454
    %v784 = vpack.c.b16 %v658, %v656
    %v785 = vpack.c.b16 %v659, %v657
    %v786 = vpack.c.b16 %v662, %v660
    %v787 = vpack.c.b16 %v663, %v661
    %v788 = vpack.c.b16 %v666, %v664
    %v789 = vpack.c.b16 %v667, %v665
    %v790 = vpack.c.b16 %v670, %v668
    %v791 = vpack.c.b16 %v671, %v669
    %v792 = vpack.c.b16 %v674, %v672
    %v793 = vpack.c.b16 %v675, %v673
    %v794 = vpack.c.b16 %v678, %v676
    %v795 = vpack.c.b16 %v679, %v677
    %v796 = vpack.c.b16 %v682, %v680
    %v797 = vpack.c.b16 %v683, %v681
    %v798 = vpack.c.b16 %v686, %v684
    %v799 = vpack.c.b16 %v687, %v685
    %v800 = vpack.c.b16 %v690, %v688
    %v801 = vpack.c.b16 %v691, %v689
    %v802 = vpack.c.b16 %v694, %v692
    %v803 = vpack.c.b16 %v695, %v693
    %v804 = vpack.c.b16 %v698, %v696
    %v805 = vpack.c.b16 %v699, %v697
    %v806 = vpack.c.b16 %v702, %v700
    %v807 = vpack.c.b16 %v703, %v701
    %v808 = vpack.c.b16 %v706, %v704
    %v809 = vpack.c.b16 %v707, %v705
    %v810 = vpack.c.b16 %v710, %v708
    %v811 = vpack.c.b16 %v711, %v709
    %v812 = vpack.c.b16 %v714, %v712
    %v813 = vpack.c.b16 %v715, %v713
    %v814 = vpack.c.b16 %v718, %v716
    %v815 = vpack.c.b16 %v719, %v717
    %v816 = vpack.c.b16 %v722, %v720
    %v817 = vpack.c.b16 %v723, %v721
    %v818 = vpack.c.b16 %v726, %v724
    %v819 = vpack.c.b16 %v727, %v725
    %v820 = vpack.c.b16 %v730, %v728
    %v821 = vpack.c.b16 %v731, %v729
    %v822 = vpack.c.b16 %v734, %v732
    %v823 = vpack.c.b16 %v735, %v733
    %v824 = vpack.c.b16 %v738, %v736
    %v825 = vpack.c.b16 %v739, %v737
    %v826 = vpack.c.b16 %v742, %v740
    %v827 = vpack.c.b16 %v743, %v741
    %v828 = vpack.c.b16 %v746, %v744
    %v829 = vpack.c.b16 %v747, %v745
    %v830 = vpack.c.b16 %v750, %v748
    %v831 = vpack.c.b16 %v751, %v749
    %v832 = vpack.c.b16 %v754, %v752
    %v833 = vpack.c.b16 %v755, %v753
    %v834 = vpack.c.b16 %v758, %v756
    %v835 = vpack.c.b16 %v759, %v757
    %v836 = vpack.c.b16 %v762, %v760
    %v837 = vpack.c.b16 %v763, %v761
    %v838 = vpack.c.b16 %v766, %v764
    %v839 = vpack.c.b16 %v767, %v765
    %v840 = vpack.c.b16 %v770, %v768
    %v841 = vpack.c.b16 %v771, %v769
    %v842 = vpack.c.b16 %v774, %v772
    %v843 = vpack.c.b16 %v775, %v773
    %v844 = vpack.c.b16 %v778, %v776
    %v845 = vpack.c.b16 %v779, %v777
    %v846 = vpack.c.b16 %v782, %v780
    %v847 = vpack.c.b16 %v783, %v781
    %912 = vmatprep.subr.bf16.mxu0 %v785
    %913 = vmatpush1.bf16.msra.mxu0 %v784
    %914 = vmatprep.subr.bf16.mxu0 %v787
    %915 = vmatpush1.bf16.msra.mxu0 %v786
    %916 = vmatprep.subr.bf16.mxu0 %v789
    %917 = vmatpush1.bf16.msra.mxu0 %v788
    %918 = vmatprep.subr.bf16.mxu0 %v791
    %919 = vmatpush1.bf16.msra.mxu0 %v790
    %920 = vmatprep.subr.bf16.mxu0 %v793
    %921 = vmatpush1.bf16.msra.mxu0 %v792
    %922 = vmatprep.subr.bf16.mxu0 %v795
    %923 = vmatpush1.bf16.msra.mxu0 %v794
    %924 = vmatprep.subr.bf16.mxu0 %v797
    %925 = vmatpush1.bf16.msra.mxu0 %v796
    %926 = vmatprep.subr.bf16.mxu0 %v799
    %927 = vmatpush1.bf16.msra.mxu0 %v798
    %928 = vmatprep.subr.bf16.mxu0 %v801
    %929 = vmatpush1.bf16.msra.mxu0 %v800
    %930 = vmatprep.subr.bf16.mxu0 %v803
    %931 = vmatpush1.bf16.msra.mxu0 %v802
    %932 = vmatprep.subr.bf16.mxu0 %v805
    %933 = vmatpush1.bf16.msra.mxu0 %v804
    %934 = vmatprep.subr.bf16.mxu0 %v807
    %935 = vmatpush1.bf16.msra.mxu0 %v806
    %936 = vmatprep.subr.bf16.mxu0 %v809
    %937 = vmatpush1.bf16.msra.mxu0 %v808
    %938 = vmatprep.subr.bf16.mxu0 %v811
    %939 = vmatpush1.bf16.msra.mxu0 %v810
    %940 = vmatprep.subr.bf16.mxu0 %v813
    %941 = vmatpush1.bf16.msra.mxu0 %v812
    %942 = vmatprep.subr.bf16.mxu0 %v815
    %943 = vmatpush1.bf16.msra.mxu0 %v814
    %944 = vmatprep.mubr.bf16.mxu0 %v388
    %945 = vmatmul.mubr.bf16.gmra.mrb[0].mxu0 %v387
    %v946 = vpop.f32.mrb[0].mxu0
    %v947 = vadd.f32 %v586, %v946
    %v948 = vpop.f32.mrb[0].mxu0
    %v949 = vadd.f32 %v588, %v948
    %v950 = vpop.f32.mrb[0].mxu0
    %v951 = vpop.f32.mrb[0].mxu0
    %952 = vdwg.mxu0
    %953 = vmatprep.subr.bf16.mxu0 %v817
    %954 = vmatpush1.bf16.msra.mxu0 %v816
    %955 = vmatprep.subr.bf16.mxu0 %v819
    %956 = vmatpush1.bf16.msra.mxu0 %v818
    %957 = vmatprep.subr.bf16.mxu0 %v821
    %958 = vmatpush1.bf16.msra.mxu0 %v820
    %959 = vmatprep.subr.bf16.mxu0 %v823
    %960 = vmatpush1.bf16.msra.mxu0 %v822
    %961 = vmatprep.subr.bf16.mxu0 %v825
    %962 = vmatpush1.bf16.msra.mxu0 %v824
    %963 = vmatprep.subr.bf16.mxu0 %v827
    %964 = vmatpush1.bf16.msra.mxu0 %v826
    %965 = vmatprep.subr.bf16.mxu0 %v829
    %966 = vmatpush1.bf16.msra.mxu0 %v828
    %967 = vmatprep.subr.bf16.mxu0 %v831
    %968 = vmatpush1.bf16.msra.mxu0 %v830
    %969 = vmatprep.subr.bf16.mxu0 %v833
    %970 = vmatpush1.bf16.msra.mxu0 %v832
    %971 = vmatprep.subr.bf16.mxu0 %v835
    %972 = vmatpush1.bf16.msra.mxu0 %v834
    %973 = vmatprep.subr.bf16.mxu0 %v837
    %974 = vmatpush1.bf16.msra.mxu0 %v836
    %975 = vmatprep.subr.bf16.mxu0 %v839
    %976 = vmatpush1.bf16.msra.mxu0 %v838
    %977 = vmatprep.subr.bf16.mxu0 %v841
    %978 = vmatpush1.bf16.msra.mxu0 %v840
    %979 = vmatprep.subr.bf16.mxu0 %v843
    %980 = vmatpush1.bf16.msra.mxu0 %v842
    %981 = vmatprep.subr.bf16.mxu0 %v845
    %982 = vmatpush1.bf16.msra.mxu0 %v844
    %983 = vmatprep.subr.bf16.mxu0 %v847
    %984 = vmatpush1.bf16.msra.mxu0 %v846
    %985 = vmatprep.mubr.bf16.mxu0 %v390
    %986 = vmatmul.mubr.bf16.gmra.mrb[0].mxu0 %v389
    %v987 = vpop.f32.mrb[0].mxu0
    %v988 = vadd.f32 %v947, %v987
    %v989 = vpop.f32.mrb[0].mxu0
    %v990 = vadd.f32 %v949, %v989
    %v991 = vpop.f32.mrb[0].mxu0
    %v992 = vpop.f32.mrb[0].mxu0
    %993 = vdwg.mxu0
    %v994 = vld [vmem:[%s4] sm:$0x3]
    %v996 = vlaneseq
    %v997 = vshrl.u32 %v996, 7
    %v998 = vsub.s32 0, %v997
    %v999 = vrot.slane %v994, %v998
    %v1000 = vlaneseq
    %v1001 = vshrl.u32 %v1000, 7
    %v1002 = vsub.s32 1, %v1001
    %v1003 = vrot.slane %v994, %v1002
    %v1006 = vadd.f32 %v988, %v999
    %v1007 = vadd.f32 %v990, %v1003
    %v1008 = vmax.f32 %v1006, 0.0
    %v1009 = vmax.f32 %v1007, 0.0
    %v1010 = vld [vmem:[%s6] sm:$0x3]
    %v1012 = vlaneseq
    %v1013 = vshrl.u32 %v1012, 7
    %v1014 = vsub.s32 0, %v1013
    %v1015 = vrot.slane %v1010, %v1014
    %v1016 = vlaneseq
    %v1017 = vshrl.u32 %v1016, 7
    %v1018 = vsub.s32 1, %v1017
    %v1019 = vrot.slane %v1010, %v1018
    %v1022 = vmul.f32 %v1008, %v1015
    %v1023 = vmul.f32 %v1009, %v1019
    %v1024 = vadd.f32 %v1022, %v1023
    %1025 = vadd.xlane.f32.xlu0 %v1024
    %v1026 = vpop.xlane.xlu0 %1025
    %v1027 = vld [vmem:[#allocation2] sm:$0x1]
    %1029 = vset.pattern.permute.xlu0 0
    %1030 = vperm.xlu0 %1029, %v1027
    %v1031 = vpop.permute.xlu0 %1030
    %v1033 = vlaneseq
    %v1034 = vshrl.u32 %v1033, 7
    %v1035 = vsub.s32 0, %v1034
    %v1036 = vrot.slane %v1031, %v1035
    %v1037 = vadd.f32 %v1026, %v1036
    %v1039 = vlaneseq
    %v1040 = vand.u32 %v1039, 127
    %v1041 = vlaneseq
    %v1042 = vshrl.u32 %v1041, 7
    %v1043 = vsub.s32 %v1040, %v1042
    %v1044 = vrot.slane %v1037, %v1043
    %vm1046 = vcmask 57344
    %1047 = vst.msk [vmem:[#allocation11] sm:$0x1] %vm1046, %v1044
    // Predicated region
    $region50: #{tpu_custom_call.1} parent=1 // pred_check
      _
    $region51: #{tpu_custom_call.1} parent=1 // pred_check_branch
      %1049 = sbr.rel (0) target = $region53
    $region52: #{tpu_custom_call.1} parent=1 // pred_region
      %s1051 = ssub.s32 16, 16
      %1052 = vsyncadd [#allocation5], %s1051
      %s1054 = sshll.u32 [#allocation11], 4
      %s1055 = int_to_ptr.vmem [resolvable:$true] %s1054
      %1057 = dma.vmem_to_hbm [thread:$0]  %s1055, 16, %s8, [#allocation5]
    $region53: #{tpu_custom_call.1} parent=1 // pred_fallthru
      _
    // Predicated region
    $region54: #{tpu_custom_call.1} parent=1 // pred_check
      _
    $region55: #{tpu_custom_call.1} parent=1 // pred_check_branch
      %1059 = sbr.rel (0) target = $region57
    $region56: #{tpu_custom_call.1} parent=1 // pred_region
      %1060 = dma.done [#allocation5], 16
    $region57: #{tpu_custom_call.1} parent=1 // pred_fallthru
      _
    %1061 = vsyncpa [#allocation4], 1
    %1062 = vsyncpa [#allocation7], 1
    %1063 = vsyncpa [#allocation10], 1
    %1064 = vsyncpa [#allocation5], 1

</llo_original>
